<compile_context>
chip_gen: v7x
topology: tpu7x:2x2x1
jax: 0.10.0
libtpu: 0.0.40
codegen_flags: <defaults>
</compile_context>

<pallas_src>
import functools

import jax
import jax.numpy as jnp
from jax import lax
from jax.experimental import pallas as pl
from jax.experimental.pallas import tpu as pltpu

EPS = 1e-5  # nn.LayerNorm default


# ------------------------------- VMEM budgeting --------------------------------
def _vmem_capacity_bytes():
    try:
        return int(pltpu.get_tpu_info().vmem_capacity_bytes)
    except Exception:
        return 64 * 1024 * 1024  # conservative fallback (v7x per-TC VMEM)


def _block_bytes(rows, c, io_itemsize):
    """VMEM footprint of one (rows, c) grid step."""
    io = rows * c * io_itemsize
    f32 = rows * c * 4
    # in + out tiles, double-buffered by the pipeline, plus ~4 block-sized f32
    # temporaries (x in f32, xc, x_hat, one scratch for the masked seq-sum).
    return 2 * 2 * io + 4 * f32


def _vmem_limit(block_bytes, vmem_cap):
    want = max(32 * 1024 * 1024, 2 * block_bytes)
    return int(min(want, int(vmem_cap * 0.8)))


# ------------------------------- LN row helper ---------------------------------
def _layernorm_rows(x, g, b):
    """x: (rows, C) f32; g, b: (1, C) f32 -> per-row LayerNorm over the last dim."""
    c = x.shape[-1]
    inv_c = 1.0 / float(c)
    mu = jnp.sum(x, axis=-1, keepdims=True) * inv_c
    xc = x - mu
    var = jnp.sum(xc * xc, axis=-1, keepdims=True) * inv_c
    return xc * lax.rsqrt(var + EPS) * g + b


# ----------------------------- single-pass kernel ------------------------------
def _single_pass_kernel(x_ref, g_ref, b_ref, o_ref, *, true_l):
    x = x_ref[...].astype(jnp.float32)        # (L, C)
    g = g_ref[...].astype(jnp.float32)        # (1, C)
    b = b_ref[...].astype(jnp.float32)        # (1, C)
    x_hat = _layernorm_rows(x, g, b)
    seq_mean = jnp.sum(x_hat, axis=0, keepdims=True) * (1.0 / float(true_l))
    o_ref[...] = (x_hat - seq_mean).astype(o_ref.dtype)


def _single_pass_call(x, g2d, b2d, vmem_limit):
    B, L, C = x.shape
    kernel = functools.partial(_single_pass_kernel, true_l=L)
    return pl.pallas_call(
        kernel,
        out_shape=jax.ShapeDtypeStruct((B, L, C), x.dtype),
        grid_spec=pltpu.PrefetchScalarGridSpec(
            num_scalar_prefetch=0,
            grid=(B,),
            in_specs=[
                pl.BlockSpec((None, L, C), lambda bi: (bi, 0, 0)),
                pl.BlockSpec((1, C), lambda bi: (0, 0)),
                pl.BlockSpec((1, C), lambda bi: (0, 0)),
            ],
            out_specs=pl.BlockSpec((None, L, C), lambda bi: (bi, 0, 0)),
        ),
        compiler_params=pltpu.CompilerParams(
            dimension_semantics=("parallel",),
            vmem_limit_bytes=vmem_limit,
        ),
    )(x, g2d, b2d)


# ------------------------------ two-pass kernels -------------------------------
def _pass1_kernel(x_ref, g_ref, b_ref, ssum_ref, *, true_l, tl):
    li = pl.program_id(1)
    x = x_ref[...].astype(jnp.float32)        # (tl, C)
    g = g_ref[...].astype(jnp.float32)
    b = b_ref[...].astype(jnp.float32)
    x_hat = _layernorm_rows(x, g, b)

    if true_l % tl != 0:
        # Partial last tile: drop out-of-range rows from the accumulation.
        row = lax.broadcasted_iota(jnp.int32, x_hat.shape, 0) + li * tl
        x_hat = jnp.where(row < true_l, x_hat, 0.0)

    @pl.when(li == 0)
    def _():
        ssum_ref[...] = jnp.zeros_like(ssum_ref)

    ssum_ref[...] += jnp.sum(x_hat, axis=0, keepdims=True)


def _pass2_kernel(x_ref, g_ref, b_ref, ssum_ref, o_ref, *, true_l):
    x = x_ref[...].astype(jnp.float32)        # (tl, C)
    g = g_ref[...].astype(jnp.float32)
    b = b_ref[...].astype(jnp.float32)
    x_hat = _layernorm_rows(x, g, b)           # recompute: cheap VPU work, no HBM x_hat
    seq_mean = ssum_ref[...] * (1.0 / float(true_l))   # (1, C) f32
    o_ref[...] = (x_hat - seq_mean).astype(o_ref.dtype)


def _two_pass_call(x, g2d, b2d, tl, vmem_limit):
    B, L, C = x.shape
    n_l = pl.cdiv(L, tl)

    p1 = functools.partial(_pass1_kernel, true_l=L, tl=tl)
    ssum = pl.pallas_call(
        p1,
        out_shape=jax.ShapeDtypeStruct((B, 1, C), jnp.float32),
        grid_spec=pltpu.PrefetchScalarGridSpec(
            num_scalar_prefetch=0,
            grid=(B, n_l),
            in_specs=[
                pl.BlockSpec((None, tl, C), lambda bi, li: (bi, li, 0)),
                pl.BlockSpec((1, C), lambda bi, li: (0, 0)),
                pl.BlockSpec((1, C), lambda bi, li: (0, 0)),
            ],
            out_specs=pl.BlockSpec((None, 1, C), lambda bi, li: (bi, 0, 0)),
        ),
        compiler_params=pltpu.CompilerParams(
            dimension_semantics=("parallel", "arbitrary"),
            vmem_limit_bytes=vmem_limit,
        ),
    )(x, g2d, b2d)

    p2 = functools.partial(_pass2_kernel, true_l=L)
    return pl.pallas_call(
        p2,
        out_shape=jax.ShapeDtypeStruct((B, L, C), x.dtype),
        grid_spec=pltpu.PrefetchScalarGridSpec(
            num_scalar_prefetch=0,
            grid=(B, n_l),
            in_specs=[
                pl.BlockSpec((None, tl, C), lambda bi, li: (bi, li, 0)),
                pl.BlockSpec((1, C), lambda bi, li: (0, 0)),
                pl.BlockSpec((1, C), lambda bi, li: (0, 0)),
                pl.BlockSpec((None, 1, C), lambda bi, li: (bi, 0, 0)),
            ],
            out_specs=pl.BlockSpec((None, tl, C), lambda bi, li: (bi, li, 0)),
        ),
        compiler_params=pltpu.CompilerParams(
            dimension_semantics=("parallel", "parallel"),
            vmem_limit_bytes=vmem_limit,
        ),
    )(x, g2d, b2d, ssum)


# ---------------------------------- wrapper ------------------------------------
@functools.partial(jax.jit, static_argnames=("force_two_pass", "tl"))
def my_layernorm(x, gamma, beta, *, force_two_pass=False, tl=None):
    """x: (B, L, C); gamma, beta: (C,) LayerNorm affine params."""
    B, L, C = x.shape
    itemsize = jnp.dtype(x.dtype).itemsize
    sub = 16 if itemsize == 2 else 8                 # sublane quantum

    g2d = gamma.reshape(1, C)
    b2d = beta.reshape(1, C)

    vmem_cap = _vmem_capacity_bytes()
    single_budget = min(56 * 1024 * 1024, int(vmem_cap * 0.45))
    tile_budget = min(12 * 1024 * 1024, vmem_cap // 8)

    full_block = _block_bytes(L, C, itemsize)
    two_pass = force_two_pass or full_block > single_budget

    if two_pass:
        if tl is not None:
            tl_pick = max(sub, min(int(tl), L))
            if tl_pick != L:
                tl_pick = max(sub, (tl_pick // sub) * sub)
        else:
            per_row = max(1, _block_bytes(1, C, itemsize))
            rows = max(1, tile_budget // per_row)
            tl_pick = L if rows >= L else max(sub, (rows // sub) * sub)
        vmem_limit = _vmem_limit(_block_bytes(tl_pick, C, itemsize), vmem_cap)
        out = _two_pass_call(x, g2d, b2d, tl_pick, vmem_limit)
    else:
        vmem_limit = _vmem_limit(full_block, vmem_cap)
        out = _single_pass_call(x, g2d, b2d, vmem_limit)
        # TODO(synk): on v7x with B == 1 the single-pass grid (B,) leaves one
        # TensorCore idle; such shapes could be routed to the L-tiled path.

    return out


# --------------------------------- reference -----------------------------------
def reference(x, gamma, beta):
    x = x.astype(jnp.float32)
    mu = jnp.mean(x, axis=-1, keepdims=True)
    var = jnp.mean((x - mu) ** 2, axis=-1, keepdims=True)
    x_hat = (x - mu) / jnp.sqrt(var + EPS) * gamma + beta
    bias = jnp.mean(x_hat, axis=1, keepdims=True)
    return x_hat - bias


if __name__ == "__main__":
    key = jax.random.PRNGKey(0)
    k1, k2, k3, k4, k5 = jax.random.split(key, 5)

    # Case 1: canonical small shape (single-pass path, C=32 kept unpadded).
    B, L, C = 2, 8, 32
    x = jax.random.normal(k1, (B, L, C), dtype=jnp.float32)
    gamma = jnp.ones((C,), dtype=jnp.float32)   # nn.LayerNorm default init
    beta = jnp.zeros((C,), dtype=jnp.float32)

    out = jax.block_until_ready(my_layernorm(x, gamma, beta))
    ref = reference(x, gamma, beta)
    assert out.shape == (B, L, C)
    assert jnp.allclose(out, ref, atol=1e-5, rtol=1e-5), "single-pass mismatch"

    # Case 2: L-tiled two-pass path (seq-sum accumulator + LN recompute in pass 2).
    B2, L2, C2 = 2, 64, 32
    x2 = jax.random.normal(k2, (B2, L2, C2), dtype=jnp.float32)
    g2 = jax.random.normal(k3, (C2,), dtype=jnp.float32)
    b2 = jax.random.normal(k4, (C2,), dtype=jnp.float32)

    out2 = jax.block_until_ready(
        my_layernorm(x2, g2, b2, force_two_pass=True, tl=16))
    ref2 = reference(x2, g2, b2)
    assert out2.shape == (B2, L2, C2)
    assert jnp.allclose(out2, ref2, atol=1e-5, rtol=1e-5), "two-pass mismatch"

    # Case 3: non-divisor L tile (masked partial last tile: 40 = 16 + 16 + 8).
    B3, L3, C3 = 2, 40, 32
    x3 = jax.random.normal(k5, (B3, L3, C3), dtype=jnp.float32)
    out3 = jax.block_until_ready(
        my_layernorm(x3, gamma, beta, force_two_pass=True, tl=16))
    ref3 = reference(x3, gamma, beta)
    assert out3.shape == (B3, L3, C3)
    assert jnp.allclose(out3, ref3, atol=1e-5, rtol=1e-5), "partial-tile mismatch"

    print("KERNEL_OK")
</pallas_src>

<mosaic_0001>
module attributes {stable_mosaic.version = 11 : i64} {
  func.func @_single_pass_kernel(%arg0: i32, %arg1: memref<1x8x32xf32, #tpu.memory_space<vmem>>, %arg2: memref<1x32xf32, #tpu.memory_space<vmem>>, %arg3: memref<1x32xf32, #tpu.memory_space<vmem>>, %arg4: memref<1x8x32xf32, #tpu.memory_space<vmem>>) attributes {dimension_semantics = [#tpu.dimension_semantics<parallel>], iteration_bounds = array<i64: 2>, scalar_prefetch = 0 : i64, scratch_operands = 0 : i64, tpu.core_type = #tpu.core_type<tc>, window_params = [{transform_indices = @transform_0, window_bounds = array<i64: 1, 8, 32>}, {pipeline_mode = #tpu.pipeline_mode<synchronous>, transform_indices = @transform_1, window_bounds = array<i64: 1, 32>}, {pipeline_mode = #tpu.pipeline_mode<synchronous>, transform_indices = @transform_2, window_bounds = array<i64: 1, 32>}, {transform_indices = @transform_3, window_bounds = array<i64: 1, 8, 32>}]} {
    %c0 = arith.constant 0 : index
    %c0_0 = arith.constant 0 : index
    %c0_1 = arith.constant 0 : index
    %0 = vector.load %arg1[%c0, %c0_0, %c0_1] : memref<1x8x32xf32, #tpu.memory_space<vmem>>, vector<1x8x32xf32>
    %1 = vector.shape_cast %0 : vector<1x8x32xf32> to vector<8x32xf32>
    %c0_2 = arith.constant 0 : index
    %c0_3 = arith.constant 0 : index
    %2 = vector.load %arg2[%c0_2, %c0_3] : memref<1x32xf32, #tpu.memory_space<vmem>>, vector<1x32xf32>
    %c0_4 = arith.constant 0 : index
    %c0_5 = arith.constant 0 : index
    %3 = vector.load %arg3[%c0_4, %c0_5] : memref<1x32xf32, #tpu.memory_space<vmem>>, vector<1x32xf32>
    %cst = arith.constant dense<0.000000e+00> : vector<8xf32>
    %4 = vector.multi_reduction <add>, %1, %cst [1] : vector<8x32xf32> to vector<8xf32>
    %5 = vector.shape_cast %4 : vector<8xf32> to vector<8x1xf32>
    %cst_6 = arith.constant 3.125000e-02 : f32
    %6 = vector.broadcast %cst_6 : f32 to vector<8x1xf32>
    %7 = arith.mulf %5, %6 : vector<8x1xf32>
    %8 = vector.broadcast %7 : vector<8x1xf32> to vector<8x32xf32>
    %9 = arith.subf %1, %8 : vector<8x32xf32>
    %10 = arith.mulf %9, %9 : vector<8x32xf32>
    %cst_7 = arith.constant dense<0.000000e+00> : vector<8xf32>
    %11 = vector.multi_reduction <add>, %10, %cst_7 [1] : vector<8x32xf32> to vector<8xf32>
    %12 = vector.shape_cast %11 : vector<8xf32> to vector<8x1xf32>
    %cst_8 = arith.constant 3.125000e-02 : f32
    %13 = vector.broadcast %cst_8 : f32 to vector<8x1xf32>
    %14 = arith.mulf %12, %13 : vector<8x1xf32>
    %cst_9 = arith.constant 9.99999974E-6 : f32
    %15 = vector.broadcast %cst_9 : f32 to vector<8x1xf32>
    %16 = arith.addf %14, %15 : vector<8x1xf32>
    %17 = math.rsqrt %16 : vector<8x1xf32>
    %18 = vector.broadcast %17 : vector<8x1xf32> to vector<8x32xf32>
    %19 = arith.mulf %9, %18 : vector<8x32xf32>
    %20 = vector.broadcast %2 : vector<1x32xf32> to vector<8x32xf32>
    %21 = arith.mulf %19, %20 : vector<8x32xf32>
    %22 = vector.broadcast %3 : vector<1x32xf32> to vector<8x32xf32>
    %23 = arith.addf %21, %22 : vector<8x32xf32>
    %cst_10 = arith.constant dense<0.000000e+00> : vector<32xf32>
    %24 = vector.multi_reduction <add>, %23, %cst_10 [0] : vector<8x32xf32> to vector<32xf32>
    %25 = vector.shape_cast %24 : vector<32xf32> to vector<1x32xf32>
    %cst_11 = arith.constant 1.250000e-01 : f32
    %26 = vector.broadcast %cst_11 : f32 to vector<1x32xf32>
    %27 = arith.mulf %25, %26 : vector<1x32xf32>
    %28 = vector.broadcast %27 : vector<1x32xf32> to vector<8x32xf32>
    %29 = arith.subf %23, %28 : vector<8x32xf32>
    %c0_12 = arith.constant 0 : index
    %c0_13 = arith.constant 0 : index
    %c0_14 = arith.constant 0 : index
    %30 = vector.load %arg4[%c0_12, %c0_13, %c0_14] : memref<1x8x32xf32, #tpu.memory_space<vmem>>, vector<1x8x32xf32>
    %31 = vector.shape_cast %30 : vector<1x8x32xf32> to vector<8x32xf32>
    %32 = vector.shape_cast %29 : vector<8x32xf32> to vector<1x8x32xf32>
    tpu.vector_store %arg4[%c0_12, %c0_13, %c0_14], %32 {strides = array<i32>} : memref<1x8x32xf32, #tpu.memory_space<vmem>>, vector<1x8x32xf32>,
    return
  }
  func.func @transform_0(%arg0: i32) -> (i32, i32, i32) {
    %c0_i32 = arith.constant 0 : i32
    %c0_i32_0 = arith.constant 0 : i32
    %c0_i32_1 = arith.constant 0 : i32
    return %arg0, %c0_i32, %c0_i32_0 : i32, i32, i32
  }
  func.func @transform_1(%arg0: i32) -> (i32, i32) {
    %c0_i32 = arith.constant 0 : i32
    %c0_i32_0 = arith.constant 0 : i32
    %c0_i32_1 = arith.constant 0 : i32
    return %c0_i32, %c0_i32_0 : i32, i32
  }
  func.func @transform_2(%arg0: i32) -> (i32, i32) {
    %c0_i32 = arith.constant 0 : i32
    %c0_i32_0 = arith.constant 0 : i32
    %c0_i32_1 = arith.constant 0 : i32
    return %c0_i32, %c0_i32_0 : i32, i32
  }
  func.func @transform_3(%arg0: i32) -> (i32, i32, i32) {
    %c0_i32 = arith.constant 0 : i32
    %c0_i32_0 = arith.constant 0 : i32
    %c0_i32_1 = arith.constant 0 : i32
    return %arg0, %c0_i32, %c0_i32_0 : i32, i32, i32
  }
}

</mosaic_0001>

<llo_original>
// kernel: my_layernorm.1
$region0: #{my_layernorm.1}
  #allocation0 [shape = 'u32[]', space=smem, size = 0x4, offset = 0x4, fixed_abs, tag = 'smem constant byte address 0x4 - core index']
  #allocation1 [shape = 'u32[144,128]{1,0:T(1,128)}', space=vmem, size = 0x12000, scoped, tag = 'internal scratch']
  %s0 = inlined_call_operand.hbm [shape: f32[2,8,32], index: 0, kind: input, shape index: {}]
  %s1 = inlined_call_operand.vmem [shape: f32[1,32], index: 1, kind: input, shape index: {}]
  %s2 = inlined_call_operand.vmem [shape: f32[1,32], index: 2, kind: input, shape index: {}]
  %s3 = inlined_call_operand.hbm [shape: f32[2,8,32], index: 3, kind: output, shape index: {}]
  %s4 = sld [smem:[#allocation0]]
  $region49: #{my_layernorm.1} parent=0
    _
  %s6 = ssub.s32 1, %s4
  %s7 = scalar_select 0, %s6, %s4
  $region1: #{my_layernorm.1} parent=0
    #allocation2 [shape = 'u8[8192]{0}', space=vmem, size = 0x2000, scoped, tag = 'input window, operand 0']
    #allocation3 [shape = 's32[2]{0}', space=sflag, size = 0x8, scoped, tag = 'scoped memory for my_layernorm.1']
    #allocation4 [shape = 's32[2]{0}', space=sflag, size = 0x8, scoped, tag = 'scoped memory for my_layernorm.1']
    #allocation5 [shape = 'u8[8192]{0}', space=vmem, size = 0x2000, scoped, tag = 'output window, operand 0']
    %8 = vsyncpa [#allocation3], 0
    %s9 = scalar_lea.sflag [#allocation3], 1
    %10 = vsyncpa %s9, 0
    %11 = vsyncpa [#allocation4], 0
    %s12 = scalar_lea.sflag [#allocation4], 1
    %13 = vsyncpa %s12, 0
    loop: start=0, step=1, limit=4
    $region2: #{my_layernorm.1} parent=1 // loop_pre_header
      _
    $region3: #{my_layernorm.1} parent=1 // loop_header
      %s15 = sphi 0, %s19
      %p16 = scmp.ge.s32.totalorder %s15, 4
      %s25 = sphi 0, %s27
      %s28 = sphi 0, %s25
      %s29 = sphi 0, %s28
      %s45 = sphi 0, %s29
      %s49 = sphi 0, %s49
      %s51 = sphi 0, %s49
      %s52 = sphi 0, %s51
      %s66 = sphi 0, %s52
      %s70 = sphi 0, %s70
      %s72 = sphi 0, %s70
      %s73 = sphi 0, %s72
      %s87 = sphi 0, %s73
      %s93 = sphi 0, %s95
      %s96 = sphi 0, %s93
      %s97 = sphi 0, %s96
      %s113 = sphi 0, %s97
    $region4: #{my_layernorm.1} parent=1 // loop_header_branch
      %18 = sbr.rel (%p16) target = $region8
    $region5: #{my_layernorm.1} parent=1 // loop_body
      %s20 = ssub.s32 %s15, 1
      %s21 = ssub.s32 %s15, 2
      %s22 = sadd.s32 %s15, 1
      %s23 = ssub.s32 %s15, %s22
      %p24 = scmp.eq.s32.totalorder %s23, 0
      %s26 = sadd.s32 %s25, 1
      %s27 = scalar_select %p24, %s25, %s26
      %p30 = pneg %p24
      %p31 = scmp.eq.s32.totalorder %s15, 1
      %p32 = por %p30, %p31
      %p33 = scmp.ne.s32.totalorder %s25, %s28
      %p34 = scmp.eq.s32.totalorder %s15, 0
      %p35 = por %p33, %p34
      %p36 = scmp.ne.s32.totalorder %s25, %s28
      %p37 = scmp.eq.s32.totalorder %s20, 1
      %p38 = por %p36, %p37
      %p39 = scmp.ne.s32.totalorder %s28, %s29
      %p40 = scmp.eq.s32.totalorder %s20, 0
      %p41 = por %p39, %p40
      %p42 = scmp.ne.s32.totalorder %s28, %s29
      %p43 = scmp.eq.s32.totalorder %s21, 1
      %p44 = por %p42, %p43
      %p46 = scmp.ne.s32.totalorder %s29, %s45
      %p47 = scmp.eq.s32.totalorder %s21, 0
      %p48 = por %p46, %p47
      %s50 = sadd.s32 %s49, 1
      %p53 = scmp.eq.s32.totalorder %s15, 1
      %p54 = scmp.ne.s32.totalorder %s49, %s51
      %p55 = scmp.eq.s32.totalorder %s15, 0
      %p56 = por %p54, %p55
      %p57 = scmp.ne.s32.totalorder %s49, %s51
      %p58 = scmp.eq.s32.totalorder %s20, 1
      %p59 = por %p57, %p58
      %p60 = scmp.ne.s32.totalorder %s51, %s52
      %p61 = scmp.eq.s32.totalorder %s20, 0
      %p62 = por %p60, %p61
      %p63 = scmp.ne.s32.totalorder %s51, %s52
      %p64 = scmp.eq.s32.totalorder %s21, 1
      %p65 = por %p63, %p64
      %p67 = scmp.ne.s32.totalorder %s52, %s66
      %p68 = scmp.eq.s32.totalorder %s21, 0
      %p69 = por %p67, %p68
      %s71 = sadd.s32 %s70, 1
      %p74 = scmp.eq.s32.totalorder %s15, 1
      %p75 = scmp.ne.s32.totalorder %s70, %s72
      %p76 = scmp.eq.s32.totalorder %s15, 0
      %p77 = por %p75, %p76
      %p78 = scmp.ne.s32.totalorder %s70, %s72
      %p79 = scmp.eq.s32.totalorder %s20, 1
      %p80 = por %p78, %p79
      %p81 = scmp.ne.s32.totalorder %s72, %s73
      %p82 = scmp.eq.s32.totalorder %s20, 0
      %p83 = por %p81, %p82
      %p84 = scmp.ne.s32.totalorder %s72, %s73
      %p85 = scmp.eq.s32.totalorder %s21, 1
      %p86 = por %p84, %p85
      %p88 = scmp.ne.s32.totalorder %s73, %s87
      %p89 = scmp.eq.s32.totalorder %s21, 0
      %p90 = por %p88, %p89
      %s91 = ssub.s32 %s15, %s22
      %p92 = scmp.eq.s32.totalorder %s91, 0
      %s94 = sadd.s32 %s93, 1
      %s95 = scalar_select %p92, %s93, %s94
      %p98 = pneg %p92
      %p99 = scmp.eq.s32.totalorder %s15, 1
      %p100 = por %p98, %p99
      %p101 = scmp.ne.s32.totalorder %s93, %s96
      %p102 = scmp.eq.s32.totalorder %s15, 0
      %p103 = por %p101, %p102
      %p104 = scmp.ne.s32.totalorder %s93, %s96
      %p105 = scmp.eq.s32.totalorder %s20, 1
      %p106 = por %p104, %p105
      %p107 = scmp.ne.s32.totalorder %s96, %s97
      %p108 = scmp.eq.s32.totalorder %s20, 0
      %p109 = por %p107, %p108
      %p110 = scmp.ne.s32.totalorder %s96, %s97
      %p111 = scmp.eq.s32.totalorder %s21, 1
      %p112 = por %p110, %p111
      %p114 = scmp.ne.s32.totalorder %s97, %s113
      %p115 = scmp.eq.s32.totalorder %s21, 0
      %p116 = por %p114, %p115
      %p117 = scmp.le.s32.totalorder 1, %s15
      %p118 = scmp.lt.s32.totalorder %s15, 3
      %p119 = pnand %p117, %p118
      %p120 = pneg %p119
      // Predicated region
      $region9: #{my_layernorm.1} parent=5 // pred_check
        _
      $region10: #{my_layernorm.1} parent=5 // pred_check_branch
        %122 = sbr.rel (%p119) target = $region12
      $region11: #{my_layernorm.1} parent=5 // pred_region
        %s123 = ssub.s32 %s15, 1
        // Predicated region
        $region13: #{my_layernorm.1} parent=11 // pred_check
          %p124 = pneg %p62
        $region14: #{my_layernorm.1} parent=11 // pred_check_branch
          %126 = sbr.rel (%p124) target = $region16
        $region15: #{my_layernorm.1} parent=11 // pred_region
          _
        $region16: #{my_layernorm.1} parent=11 // pred_fallthru
          _
        // Predicated region
        $region17: #{my_layernorm.1} parent=11 // pred_check
          %p127 = pneg %p83
        $region18: #{my_layernorm.1} parent=11 // pred_check_branch
          %129 = sbr.rel (%p127) target = $region20
        $region19: #{my_layernorm.1} parent=11 // pred_region
          _
        $region20: #{my_layernorm.1} parent=11 // pred_fallthru
          _
      $region12: #{my_layernorm.1} parent=5 // pred_fallthru
        _
      %p130 = scmp.lt.s32.totalorder %s15, 2
      // Predicated region
      $region21: #{my_layernorm.1} parent=5 // pred_check
        %p131 = pneg %p130
      $region22: #{my_layernorm.1} parent=5 // pred_check_branch
        %133 = sbr.rel (%p131) target = $region24
      $region23: #{my_layernorm.1} parent=5 // pred_region
        // Predicated region
        $region25: #{my_layernorm.1} parent=23 // pred_check
          %p134 = pneg %p35
        $region26: #{my_layernorm.1} parent=23 // pred_check_branch
          %136 = sbr.rel (%p134) target = $region28
        $region27: #{my_layernorm.1} parent=23 // pred_region
          %s137 = sand.u32 %s25, 1
          %s138 = scalar_lea.sflag [#allocation3], %s137
          %s139 = sand.u32 %s25, 1
          %s140 = smul.addr %s139, 8
          %s141 = scalar_lea.vmem [#allocation2], %s140
          %s143 = ssub.s32 128, 128
          %144 = vsyncadd %s138, %s143
          %s145 = smul.addr %s15, 128
          %s146 = scalar_lea.hbm %s0, %s145
          %s148 = sshll.u32 %s141, 4
          %s149 = int_to_ptr.vmem [resolvable:$true] %s148
          %151 = dma.hbm_to_vmem [thread:$0]  %s146, 128, %s149, %s138
        $region28: #{my_layernorm.1} parent=23 // pred_fallthru
          _
      $region24: #{my_layernorm.1} parent=5 // pred_fallthru
        _
      %p152 = scmp.le.s32.totalorder 1, %s15
      %p153 = scmp.lt.s32.totalorder %s15, 3
      %p154 = pnand %p152, %p153
      %p155 = pneg %p154
      // Predicated region
      $region29: #{my_layernorm.1} parent=5 // pred_check
        _
      $region30: #{my_layernorm.1} parent=5 // pred_check_branch
        %157 = sbr.rel (%p154) target = $region32
      $region31: #{my_layernorm.1} parent=5 // pred_region
        %s158 = ssub.s32 %s15, 1
        %s159 = sand.u32 %s28, 1
        %s160 = scalar_lea.sflag [#allocation3], %s159
        %s161 = sand.u32 %s28, 1
        %s162 = smul.addr %s161, 8
        %s163 = scalar_lea.vmem [#allocation2], %s162
        // Predicated region
        $region33: #{my_layernorm.1} parent=31 // pred_check
          %p164 = pneg %p41
        $region34: #{my_layernorm.1} parent=31 // pred_check_branch
          %166 = sbr.rel (%p164) target = $region36
        $region35: #{my_layernorm.1} parent=31 // pred_region
          %167 = dma.done %s160, 128
        $region36: #{my_layernorm.1} parent=31 // pred_fallthru
          _
        %s168 = sand.u32 %s28, 1
        %s169 = scalar_lea.sflag [#allocation3], %s168
        %s170 = sand.u32 %s28, 1
        %s171 = smul.addr %s170, 8
        %s172 = scalar_lea.vmem [#allocation2], %s171
        %p173 = pneg %p41
        %p174 = pneg %p38
        %p175 = pneg %p62
        %p176 = pneg %p59
        %p177 = pneg %p83
        %p178 = pneg %p80
        %p179 = pneg %p109
        %p180 = pneg %p106
        %s181 = sand.u32 %s96, 1
        %s182 = scalar_lea.sflag [#allocation4], %s181
        %s183 = sand.u32 %s96, 1
        %s184 = smul.addr %s183, 8
        %s185 = scalar_lea.vmem [#allocation5], %s184
        %v186 = vld [vmem:[%s163] sm:$0xff]
        %v187 = vld [vmem:[%s1] sm:$0x1]
        %v188 = vld [vmem:[%s2] sm:$0x1]
        %vm189 = vcmask 261120
        %v190 = vsel %vm189, %v186, 0.0
        %191 = vadd.xlane.f32.xlu0 %v190
        %v192 = vpop.xlane.xlu0 %191
        %v193 = vmul.f32 %v192, 0.03125
        %v194 = vsub.f32 %v186, %v193
        %v195 = vmul.f32 %v194, %v194
        %v196 = vsel %vm189, %v195, 0.0
        %197 = vadd.xlane.f32.xlu0 %v196
        %v198 = vpop.xlane.xlu0 %197
        %v199 = vmul.f32 %v198, 0.03125
        %v200 = vadd.f32 %v199, 1e-05
        %v201 = vrsqrt.pop %v200
        %v202 = vmul.f32 %v194, %v201
        %v204 = vlaneseq
        %v205 = vshrl.u32 %v204, 7
        %v206 = vsub.s32 0, %v205
        %v207 = vrot.slane %v187, %v206
        %v209 = vmul.f32 %v202, %v207
        %v211 = vlaneseq
        %v212 = vshrl.u32 %v211, 7
        %v213 = vsub.s32 0, %v212
        %v214 = vrot.slane %v188, %v213
        %v216 = vadd.f32 %v209, %v214
        %v217 = vsel %vm189, %v216, 0.0
        %v218 = vrot.slane %v217, 4
        %v219 = vadd.f32 %v217, %v218
        %v220 = vrot.slane %v219, 2
        %v221 = vadd.f32 %v219, %v220
        %v222 = vrot.slane %v221, 1
        %v223 = vadd.f32 %v221, %v222
        %v224 = vmul.f32 %v223, 0.125
        %v225 = vsub.f32 %v216, %v224
        %226 = vst.msk [vmem:[%s185] sm:$0xff] %vm189, %v225
        %s227 = sand.u32 %s96, 1
        %s228 = scalar_lea.sflag [#allocation4], %s227
        %s229 = sand.u32 %s96, 1
        %s230 = smul.addr %s229, 8
        %s231 = scalar_lea.vmem [#allocation5], %s230
        // Predicated region
        $region37: #{my_layernorm.1} parent=31 // pred_check
          %p232 = pneg %p106
        $region38: #{my_layernorm.1} parent=31 // pred_check_branch
          %234 = sbr.rel (%p232) target = $region40
        $region39: #{my_layernorm.1} parent=31 // pred_region
          %s236 = ssub.s32 128, 128
          %237 = vsyncadd %s228, %s236
          %s238 = smul.addr %s20, 128
          %s239 = scalar_lea.hbm %s3, %s238
          %s241 = sshll.u32 %s231, 4
          %s242 = int_to_ptr.vmem [resolvable:$true] %s241
          %244 = dma.vmem_to_hbm [thread:$0]  %s242, 128, %s239, %s228
        $region40: #{my_layernorm.1} parent=31 // pred_fallthru
          _
      $region32: #{my_layernorm.1} parent=5 // pred_fallthru
        _
      %p245 = scmp.le.s32.totalorder 2, %s15
      // Predicated region
      $region41: #{my_layernorm.1} parent=5 // pred_check
        %p246 = pneg %p245
      $region42: #{my_layernorm.1} parent=5 // pred_check_branch
        %248 = sbr.rel (%p246) target = $region44
      $region43: #{my_layernorm.1} parent=5 // pred_region
        %s249 = ssub.s32 %s15, 2
        // Predicated region
        $region45: #{my_layernorm.1} parent=43 // pred_check
          %p250 = pneg %p112
        $region46: #{my_layernorm.1} parent=43 // pred_check_branch
          %252 = sbr.rel (%p250) target = $region48
        $region47: #{my_layernorm.1} parent=43 // pred_region
          %s253 = sand.u32 %s97, 1
          %s254 = scalar_lea.sflag [#allocation4], %s253
          %s255 = sand.u32 %s97, 1
          %s256 = smul.addr %s255, 8
          %s257 = scalar_lea.vmem [#allocation5], %s256
          %258 = dma.done %s254, 128
        $region48: #{my_layernorm.1} parent=43 // pred_fallthru
          _
      $region44: #{my_layernorm.1} parent=5 // pred_fallthru
        _
    $region6: #{my_layernorm.1} parent=1 // loop_footer
      %s19 = sadd.s32 1, %s15
    $region7: #{my_layernorm.1} parent=1 // loop_footer_branch
      %14 = sbr.rel target = $region3
    $region8: #{my_layernorm.1} parent=1 // loop_exit
      _
    %259 = vsyncpa [#allocation3], 1
    %s260 = scalar_lea.sflag [#allocation3], 1
    %261 = vsyncpa %s260, 1
    %262 = vsyncpa [#allocation4], 1
    %s263 = scalar_lea.sflag [#allocation4], 1
    %264 = vsyncpa %s263, 1

</llo_original>
